<compile_context>
chip_gen: v7x
topology: tpu7x:2x2x1
jax: 0.10.0
libtpu: 0.0.40
codegen_flags: <defaults>
</compile_context>

<pallas_src>
import jax
import jax.numpy as jnp
from jax.experimental import pallas as pl
from jax.experimental.pallas import tpu as pltpu


_LANE = 128          # lane width (last dim granularity)
_ROW_PACK = 16       # sublane granularity for bf16-packed tiles
_BN_EPS = 1e-5


def _round_up(v, m):
    return (v + m - 1) // m * m


# ---------------------------------------------------------------------------
# Kernels (row-tiled grids; weights/biases resident as full VMEM blocks)
# ---------------------------------------------------------------------------

def _ft_relu_kernel(x_ref, w_ref, b_ref, o_ref):
    # h0 = relu(x @ Wft_T + bft)   (bf16 MXU operands, f32 accumulation)
    h = jnp.dot(x_ref[...], w_ref[...], preferred_element_type=jnp.float32)
    h = jnp.maximum(h + b_ref[...], 0.0)
    o_ref[...] = h.astype(o_ref.dtype)


def _gin_layer_kernel(adj_ref, h_ref, w_ref, b_ref, o_ref):
    # GINConv(eps=0) + folded eval-mode BatchNorm + ReLU:
    #   h_new = relu( ((A + I) @ h) @ W_fold + b_fold )
    # adj_ref: (TILE_N, N_pad) bf16 row slab of (A + I)
    # h_ref:   (N_pad, emb_pad) bf16 full previous-layer activations
    agg = jnp.dot(adj_ref[...], h_ref[...], preferred_element_type=jnp.float32)
    h = jnp.dot(agg.astype(jnp.bfloat16), w_ref[...],
                preferred_element_type=jnp.float32)
    h = jnp.maximum(h + b_ref[...], 0.0)
    # TODO(synk): stochastic Dropout omitted (inference / eval semantics).
    o_ref[...] = h.astype(o_ref.dtype)


def _mlp_sigmoid_kernel(h_ref, w_ref, b_ref, o_ref):
    # out = sigmoid(h @ Wmlp_pad + bmlp_pad); lane-dense (TILE_N, 128) output,
    # only column 0 is real (caller slices [:, :1]).
    logits = jnp.dot(h_ref[...].astype(jnp.float32), w_ref[...],
                     preferred_element_type=jnp.float32) + b_ref[...]
    o_ref[...] = jax.nn.sigmoid(logits)


# ---------------------------------------------------------------------------
# Wrapper-side layout work: padding, transposes, BN folding, A + I
# ---------------------------------------------------------------------------

def _prepare_inputs(x, edge_index, params, num_layer):
    n, node_fea_dim = x.shape
    emb_dim = params["wft"].shape[0]

    tile_n = min(256, _round_up(n, _ROW_PACK))
    n_pad = _round_up(n, tile_n)
    fea_pad = _round_up(node_fea_dim, _LANE)
    emb_pad = _round_up(emb_dim, _LANE)

    # node features: pad, cast to bf16 (MXU operand)
    x_p = jnp.zeros((n_pad, fea_pad), jnp.float32).at[:n, :node_fea_dim].set(x)
    x_p = x_p.astype(jnp.bfloat16)

    # adjacency: (A + I), padded (extra rows/cols stay zero), bf16 (edge
    # multiplicities are exact in bf16)
    src, dst = edge_index[0], edge_index[1]
    adj = jnp.zeros((n_pad, n_pad), jnp.float32)
    adj = adj.at[dst, src].add(1.0)
    adj = adj.at[jnp.arange(n), jnp.arange(n)].add(1.0)      # + I (GIN eps=0)
    adj = adj.astype(jnp.bfloat16)

    # feature_transform: pre-transposed + padded; bf16 weight, f32 bias
    wft_t = jnp.zeros((fea_pad, emb_pad), jnp.float32)
    wft_t = wft_t.at[:node_fea_dim, :emb_dim].set(params["wft"].T)
    wft_t = wft_t.astype(jnp.bfloat16)
    bft = jnp.zeros((1, emb_pad), jnp.float32).at[0, :emb_dim].set(
        params["bft"].reshape(-1))

    # GIN layers: fold eval-mode BN into the linear
    #   y = (agg @ W.T + b) * s + (beta - mean * s),  s = gamma / sqrt(var+eps)
    s = params["gamma"] * jax.lax.rsqrt(params["var"] + _BN_EPS)   # [L, emb]
    wg_t = jnp.swapaxes(params["wg"], 1, 2) * s[:, None, :]        # [L, emb, emb]
    bg_f = (params["bg"] - params["mean"]) * s + params["beta"]    # [L, emb]
    wg_pad = jnp.zeros((num_layer, emb_pad, emb_pad), jnp.float32)
    wg_pad = wg_pad.at[:, :emb_dim, :emb_dim].set(wg_t).astype(jnp.bfloat16)
    bg_pad = jnp.zeros((num_layer, 1, emb_pad), jnp.float32)
    bg_pad = bg_pad.at[:, 0, :emb_dim].set(bg_f)

    # final mlp: [1, emb] -> lane-dense padded [emb_pad, 128] (column 0 real)
    wmlp = jnp.zeros((emb_pad, _LANE), jnp.float32)
    wmlp = wmlp.at[:emb_dim, 0].set(params["wmlp"].reshape(-1))
    bmlp = jnp.zeros((1, _LANE), jnp.float32).at[0, 0].set(
        params["bmlp"].reshape(()))

    shapes = dict(n=n, n_pad=n_pad, tile_n=tile_n,
                  fea_pad=fea_pad, emb_pad=emb_pad)
    return x_p, adj, wft_t, bft, wg_pad, bg_pad, wmlp, bmlp, shapes


def discriminator_forward(x, edge_index, params, num_layer):
    (x_p, adj, wft_t, bft, wg_pad, bg_pad, wmlp, bmlp,
     s) = _prepare_inputs(x, edge_index, params, num_layer)
    n, n_pad, tile_n = s["n"], s["n_pad"], s["tile_n"]
    fea_pad, emb_pad = s["fea_pad"], s["emb_pad"]
    grid = (n_pad // tile_n,)

    cparams = pltpu.CompilerParams(
        dimension_semantics=("parallel",),        # shard row tiles over TCs (v7x)
        vmem_limit_bytes=48 * 1024 * 1024,        # headroom under v7x's 64 MiB
    )

    def row_tile(last):
        return pl.BlockSpec((tile_n, last), lambda i: (i, 0))

    def full(shape):
        return pl.BlockSpec(shape, lambda i: (0, 0))

    # 1) h0 = relu(feature_transform(x))
    h = pl.pallas_call(
        _ft_relu_kernel,
        out_shape=jax.ShapeDtypeStruct((n_pad, emb_pad), jnp.bfloat16),
        grid=grid,
        in_specs=[row_tile(fea_pad), full((fea_pad, emb_pad)),
                  full((1, emb_pad))],
        out_specs=row_tile(emb_pad),
        compiler_params=cparams,
    )(x_p, wft_t, bft)

    # 2) per-layer GIN + folded BN + ReLU (dropout = identity in eval)
    gin_call = pl.pallas_call(
        _gin_layer_kernel,
        out_shape=jax.ShapeDtypeStruct((n_pad, emb_pad), jnp.bfloat16),
        grid=grid,
        in_specs=[row_tile(n_pad),               # (A + I) row slab
                  full((n_pad, emb_pad)),        # full previous activations
                  full((emb_pad, emb_pad)),      # folded, pre-transposed W
                  full((1, emb_pad))],           # folded bias
        out_specs=row_tile(emb_pad),
        compiler_params=cparams,
    )
    for l in range(num_layer):
        h = gin_call(adj, h, wg_pad[l], bg_pad[l])

    # 3) sigmoid(mlp(h)) -- lane-dense [n_pad, 128] output, slice to [n, 1]
    out = pl.pallas_call(
        _mlp_sigmoid_kernel,
        out_shape=jax.ShapeDtypeStruct((n_pad, _LANE), jnp.float32),
        grid=grid,
        in_specs=[row_tile(emb_pad), full((emb_pad, _LANE)),
                  full((1, _LANE))],
        out_specs=row_tile(_LANE),
        compiler_params=cparams,
    )(h, wmlp, bmlp)

    return out[:n, :1]


# ---------------------------------------------------------------------------
# Params (PyTorch layout) and a pure-JAX f32 reference for validation
# ---------------------------------------------------------------------------

def init_params(key, node_fea_dim, emb_dim, num_layer):
    ks = jax.random.split(key, 10)
    s_ft = 1.0 / jnp.sqrt(node_fea_dim)
    s_emb = 1.0 / jnp.sqrt(emb_dim)
    return {
        # feature_transform: Linear(node_fea_dim, emb_dim)
        "wft": jax.random.uniform(ks[0], (emb_dim, node_fea_dim), jnp.float32, -s_ft, s_ft),
        "bft": jax.random.uniform(ks[1], (1, emb_dim), jnp.float32, -s_ft, s_ft),
        # GIN per-layer Linear(emb_dim, emb_dim)
        "wg": jax.random.uniform(ks[2], (num_layer, emb_dim, emb_dim), jnp.float32, -s_emb, s_emb),
        "bg": jax.random.uniform(ks[3], (num_layer, emb_dim), jnp.float32, -s_emb, s_emb),
        # BatchNorm1d(emb_dim) per layer (weight, bias, running mean/var)
        "gamma": 1.0 + 0.05 * jax.random.normal(ks[4], (num_layer, emb_dim), jnp.float32),
        "beta": 0.05 * jax.random.normal(ks[5], (num_layer, emb_dim), jnp.float32),
        "mean": 0.1 * jax.random.normal(ks[6], (num_layer, emb_dim), jnp.float32),
        "var": 1.0 + 0.1 * jax.random.uniform(ks[7], (num_layer, emb_dim), jnp.float32),
        # mlp: Linear(emb_dim, 1)
        "wmlp": jax.random.uniform(ks[8], (1, emb_dim), jnp.float32, -s_emb, s_emb),
        "bmlp": jax.random.uniform(ks[9], (1, 1), jnp.float32, -s_emb, s_emb),
    }


def _reference_forward(x, edge_index, params, num_layer):
    n = x.shape[0]
    src, dst = edge_index[0], edge_index[1]
    a = jnp.zeros((n, n), jnp.float32).at[dst, src].add(1.0)
    a = a + jnp.eye(n, dtype=jnp.float32)
    h = jnp.maximum(x @ params["wft"].T + params["bft"], 0.0)
    for l in range(num_layer):
        agg = a @ h
        h = agg @ params["wg"][l].T + params["bg"][l]
        inv = jax.lax.rsqrt(params["var"][l] + _BN_EPS)
        h = (h - params["mean"][l]) * inv * params["gamma"][l] + params["beta"][l]
        h = jnp.maximum(h, 0.0)
    return jax.nn.sigmoid(h @ params["wmlp"].T + params["bmlp"])


if __name__ == "__main__":
    N = 8
    NODE_FEA_DIM = 16
    EMB_DIM = 32
    NUM_LAYER = 2

    key = jax.random.PRNGKey(0)
    k_x, k_p = jax.random.split(key)

    x = jax.random.normal(k_x, (N, NODE_FEA_DIM), jnp.float32)

    # deterministic bidirectional ring graph: 2*N edges, shape [2, 16]
    idx = jnp.arange(N, dtype=jnp.int32)
    src = jnp.concatenate([idx, (idx + 1) % N])
    dst = jnp.concatenate([(idx + 1) % N, idx])
    edge_index = jnp.stack([src, dst], axis=0)

    params = init_params(k_p, NODE_FEA_DIM, EMB_DIM, NUM_LAYER)

    out = discriminator_forward(x, edge_index, params, NUM_LAYER)
    out = jax.block_until_ready(out)

    ref = _reference_forward(x, edge_index, params, NUM_LAYER)

    assert out.shape == (N, 1)
    assert bool(jnp.all(jnp.isfinite(out)))
    assert bool(jnp.all((out >= 0.0) & (out <= 1.0)))
    # bf16 MXU operands with f32 accumulation -> loose tolerance vs f32 ref
    assert bool(jnp.max(jnp.abs(out - ref)) < 5e-2)
    print("KERNEL_OK")
</pallas_src>

<mosaic_0001>
module attributes {stable_mosaic.version = 11 : i64} {
  func.func @_ft_relu_kernel(%arg0: i32, %arg1: memref<16x128xbf16, #tpu.memory_space<vmem>>, %arg2: memref<128x128xbf16, #tpu.memory_space<vmem>>, %arg3: memref<1x128xf32, #tpu.memory_space<vmem>>, %arg4: memref<16x128xbf16, #tpu.memory_space<vmem>>) attributes {dimension_semantics = [#tpu.dimension_semantics<parallel>], iteration_bounds = array<i64: 1>, scalar_prefetch = 0 : i64, scratch_operands = 0 : i64, tpu.core_type = #tpu.core_type<tc>, window_params = [{transform_indices = @transform_0, window_bounds = array<i64: 16, 128>}, {pipeline_mode = #tpu.pipeline_mode<synchronous>, transform_indices = @transform_1, window_bounds = array<i64: 128, 128>}, {pipeline_mode = #tpu.pipeline_mode<synchronous>, transform_indices = @transform_2, window_bounds = array<i64: 1, 128>}, {transform_indices = @transform_3, window_bounds = array<i64: 16, 128>}]} {
    %c0 = arith.constant 0 : index
    %c0_0 = arith.constant 0 : index
    %0 = vector.load %arg1[%c0, %c0_0] : memref<16x128xbf16, #tpu.memory_space<vmem>>, vector<16x128xbf16>
    %c0_1 = arith.constant 0 : index
    %c0_2 = arith.constant 0 : index
    %1 = vector.load %arg2[%c0_1, %c0_2] : memref<128x128xbf16, #tpu.memory_space<vmem>>, vector<128x128xbf16>
    %cst = arith.constant dense<0.000000e+00> : vector<16x128xf32>
    %2 = tpu.matmul %0, %1, %cst {dimension_numbers = #tpu.dot_dimension_numbers<[1], [0], [0], [1], [0, 0, 1, 1], [], []>} : vector<16x128xbf16>, vector<128x128xbf16>, vector<16x128xf32> -> vector<16x128xf32>
    %c0_3 = arith.constant 0 : index
    %c0_4 = arith.constant 0 : index
    %3 = vector.load %arg3[%c0_3, %c0_4] : memref<1x128xf32, #tpu.memory_space<vmem>>, vector<1x128xf32>
    %4 = vector.broadcast %3 : vector<1x128xf32> to vector<16x128xf32>
    %5 = arith.addf %2, %4 : vector<16x128xf32>
    %cst_5 = arith.constant 0.000000e+00 : f32
    %6 = vector.broadcast %cst_5 : f32 to vector<16x128xf32>
    %7 = arith.maximumf %5, %6 : vector<16x128xf32>
    %8 = arith.truncf %7 : vector<16x128xf32> to vector<16x128xbf16>
    %c0_6 = arith.constant 0 : index
    %c0_7 = arith.constant 0 : index
    %9 = vector.load %arg4[%c0_6, %c0_7] : memref<16x128xbf16, #tpu.memory_space<vmem>>, vector<16x128xbf16>
    tpu.vector_store %arg4[%c0_6, %c0_7], %8 {strides = array<i32>} : memref<16x128xbf16, #tpu.memory_space<vmem>>, vector<16x128xbf16>,
    return
  }
  func.func @transform_0(%arg0: i32) -> (i32, i32) {
    %c0_i32 = arith.constant 0 : i32
    %c0_i32_0 = arith.constant 0 : i32
    return %arg0, %c0_i32 : i32, i32
  }
  func.func @transform_1(%arg0: i32) -> (i32, i32) {
    %c0_i32 = arith.constant 0 : i32
    %c0_i32_0 = arith.constant 0 : i32
    %c0_i32_1 = arith.constant 0 : i32
    return %c0_i32, %c0_i32_0 : i32, i32
  }
  func.func @transform_2(%arg0: i32) -> (i32, i32) {
    %c0_i32 = arith.constant 0 : i32
    %c0_i32_0 = arith.constant 0 : i32
    %c0_i32_1 = arith.constant 0 : i32
    return %c0_i32, %c0_i32_0 : i32, i32
  }
  func.func @transform_3(%arg0: i32) -> (i32, i32) {
    %c0_i32 = arith.constant 0 : i32
    %c0_i32_0 = arith.constant 0 : i32
    return %arg0, %c0_i32 : i32, i32
  }
}

</mosaic_0001>

<llo_original>
// kernel: tpu_custom_call.1
$region0: #{tpu_custom_call.1}
  #allocation0 [shape = 'u32[]', space=smem, size = 0x4, offset = 0x4, fixed_abs, tag = 'smem constant byte address 0x4 - core index']
  #allocation1 [shape = 'u32[144,128]{1,0:T(1,128)}', space=vmem, size = 0x12000, scoped, tag = 'internal scratch']
  %s0 = inlined_call_operand.hbm [shape: bf16[16,128], index: 0, kind: input, shape index: {}]
  %s1 = inlined_call_operand.hbm [shape: bf16[128,128], index: 1, kind: input, shape index: {}]
  %s2 = inlined_call_operand.vmem [shape: f32[1,128], index: 2, kind: input, shape index: {}]
  %s3 = inlined_call_operand.hbm [shape: bf16[16,128], index: 3, kind: output, shape index: {}]
  %s4 = sld [smem:[#allocation0]]
  $region30: #{tpu_custom_call.1} parent=0
    _
  %s6 = ssub.s32 1, %s4
  %s7 = scalar_select 0, %s6, %s4
  $region1: #{tpu_custom_call.1} parent=0
    #allocation2 [shape = 'u8[4096]{0}', space=vmem, size = 0x1000, scoped, tag = 'input window, operand 0, single buffered']
    #allocation3 [shape = 's32[1]{0}', space=sflag, size = 0x4, scoped, tag = 'scoped memory for tpu_custom_call.1']
    #allocation4 [shape = 's32[1]{0}', space=sflag, size = 0x4, scoped, tag = 'scoped memory for tpu_custom_call.1']
    #allocation5 [shape = 'u8[32768]{0}', space=vmem, size = 0x8000, scoped, tag = 'input window, operand 1, single buffered']
    #allocation6 [shape = 's32[1]{0}', space=sflag, size = 0x4, scoped, tag = 'scoped memory for tpu_custom_call.1']
    #allocation7 [shape = 'u8[4096]{0}', space=vmem, size = 0x1000, scoped, tag = 'output window, operand 0, single buffered']
    %8 = vsyncpa [#allocation3], 0
    %9 = vsyncpa [#allocation6], 0
    %10 = vsyncpa [#allocation4], 0
    // Predicated region
    $region2: #{tpu_custom_call.1} parent=1 // pred_check
      _
    $region3: #{tpu_custom_call.1} parent=1 // pred_check_branch
      %12 = sbr.rel (0) target = $region5
    $region4: #{tpu_custom_call.1} parent=1 // pred_region
      %s14 = ssub.s32 128, 128
      %15 = vsyncadd [#allocation3], %s14
      %s16 = sshll.u32 [#allocation2], 4
      %s17 = int_to_ptr.vmem [resolvable:$true] %s16
      %22 = dma.hbm_to_vmem [thread:$0]  %s0, 128, %s17, [#allocation3], 64, 64, 4
    $region5: #{tpu_custom_call.1} parent=1 // pred_fallthru
      _
    // Predicated region
    $region6: #{tpu_custom_call.1} parent=1 // pred_check
      _
    $region7: #{tpu_custom_call.1} parent=1 // pred_check_branch
      %24 = sbr.rel (0) target = $region9
    $region8: #{tpu_custom_call.1} parent=1 // pred_region
      %s26 = ssub.s32 1024, 1024
      %27 = vsyncadd [#allocation6], %s26
      %s28 = sshll.u32 [#allocation5], 4
      %s29 = int_to_ptr.vmem [resolvable:$true] %s28
      %34 = dma.hbm_to_vmem [thread:$0]  %s1, 1024, %s29, [#allocation6], 64, 64, 4
    $region9: #{tpu_custom_call.1} parent=1 // pred_fallthru
      _
    // Predicated region
    $region10: #{tpu_custom_call.1} parent=1 // pred_check
      _
    $region11: #{tpu_custom_call.1} parent=1 // pred_check_branch
      %36 = sbr.rel (0) target = $region13
    $region12: #{tpu_custom_call.1} parent=1 // pred_region
      _
    $region13: #{tpu_custom_call.1} parent=1 // pred_fallthru
      _
    // Predicated region
    $region14: #{tpu_custom_call.1} parent=1 // pred_check
      _
    $region15: #{tpu_custom_call.1} parent=1 // pred_check_branch
      %38 = sbr.rel (0) target = $region17
    $region16: #{tpu_custom_call.1} parent=1 // pred_region
      %39 = dma.done [#allocation3], 128
    $region17: #{tpu_custom_call.1} parent=1 // pred_fallthru
      _
    // Predicated region
    $region18: #{tpu_custom_call.1} parent=1 // pred_check
      _
    $region19: #{tpu_custom_call.1} parent=1 // pred_check_branch
      %41 = sbr.rel (0) target = $region21
    $region20: #{tpu_custom_call.1} parent=1 // pred_region
      %42 = dma.done [#allocation6], 1024
    $region21: #{tpu_custom_call.1} parent=1 // pred_fallthru
      _
    %v44 = vld [vmem:[#allocation2] sm:$0xf]
    %v45 = vld [vmem:[#allocation2 + $0x4] sm:$0xf]
    %v46 = vld [vmem:[#allocation5] sm:$0xf]
    %v47 = vld [vmem:[#allocation5 + $0x4] sm:$0xf]
    %v48 = vld [vmem:[#allocation5 + $0x8] sm:$0xf]
    %v49 = vld [vmem:[#allocation5 + $0xc] sm:$0xf]
    %v50 = vld [vmem:[#allocation5 + $0x10] sm:$0xf]
    %v51 = vld [vmem:[#allocation5 + $0x14] sm:$0xf]
    %v52 = vld [vmem:[#allocation5 + $0x18] sm:$0xf]
    %v53 = vld [vmem:[#allocation5 + $0x1c] sm:$0xf]
    %v54 = vld [vmem:[#allocation5 + $0x20] sm:$0xf]
    %v55 = vld [vmem:[#allocation5 + $0x24] sm:$0xf]
    %v56 = vld [vmem:[#allocation5 + $0x28] sm:$0xf]
    %v57 = vld [vmem:[#allocation5 + $0x2c] sm:$0xf]
    %v58 = vld [vmem:[#allocation5 + $0x30] sm:$0xf]
    %v59 = vld [vmem:[#allocation5 + $0x34] sm:$0xf]
    %v60 = vld [vmem:[#allocation5 + $0x38] sm:$0xf]
    %v61 = vld [vmem:[#allocation5 + $0x3c] sm:$0xf]
    %v62 = vld [vmem:[%s2] sm:$0x1]
    %v64 = vlaneseq
    %v65 = vshrl.u32 %v64, 7
    %v66 = vsub.s32 0, %v65
    %v67 = vrot.slane %v62, %v66
    %v71 = vunpack.c.l.b16 %v44
    %v72 = vunpack.c.l.b16 %v45
    %v73 = vpack.c.b16 %v72, %v71
    %v91 = vunpack.c.l.b16 %v46
    %v92 = vunpack.c.l.b16 %v47
    %v93 = vunpack.c.l.b16 %v48
    %v94 = vunpack.c.l.b16 %v49
    %v95 = vunpack.c.l.b16 %v50
    %v96 = vunpack.c.l.b16 %v51
    %v97 = vunpack.c.l.b16 %v52
    %v98 = vunpack.c.l.b16 %v53
    %v99 = vunpack.c.l.b16 %v54
    %v100 = vunpack.c.l.b16 %v55
    %v101 = vunpack.c.l.b16 %v56
    %v102 = vunpack.c.l.b16 %v57
    %v103 = vunpack.c.l.b16 %v58
    %v104 = vunpack.c.l.b16 %v59
    %v105 = vunpack.c.l.b16 %v60
    %v106 = vunpack.c.l.b16 %v61
    %v107 = vpack.c.b16 %v92, %v91
    %v108 = vpack.c.b16 %v94, %v93
    %v109 = vpack.c.b16 %v96, %v95
    %v110 = vpack.c.b16 %v98, %v97
    %v111 = vpack.c.b16 %v100, %v99
    %v112 = vpack.c.b16 %v102, %v101
    %v113 = vpack.c.b16 %v104, %v103
    %v114 = vpack.c.b16 %v106, %v105
    %123 = vmatprep.subr.bf16.mxu0 0
    %124 = vmatpush1.bf16.msra.mxu0 %v107
    %125 = vmatprep.subr.bf16.mxu0 0
    %126 = vmatpush1.bf16.msra.mxu0 %v108
    %127 = vmatprep.subr.bf16.mxu0 0
    %128 = vmatpush1.bf16.msra.mxu0 %v109
    %129 = vmatprep.subr.bf16.mxu0 0
    %130 = vmatpush1.bf16.msra.mxu0 %v110
    %131 = vmatprep.subr.bf16.mxu0 0
    %132 = vmatpush1.bf16.msra.mxu0 %v111
    %133 = vmatprep.subr.bf16.mxu0 0
    %134 = vmatpush1.bf16.msra.mxu0 %v112
    %135 = vmatprep.subr.bf16.mxu0 0
    %136 = vmatpush1.bf16.msra.mxu0 %v113
    %137 = vmatprep.subr.bf16.mxu0 0
    %138 = vmatpush1.bf16.msra.mxu0 %v114
    %139 = vmatprep.subr.bf16.mxu0 0
    %140 = vmatpush1.bf16.msra.mxu0 0
    %141 = vmatprep.subr.bf16.mxu0 0
    %142 = vmatpush1.bf16.msra.mxu0 0
    %143 = vmatprep.subr.bf16.mxu0 0
    %144 = vmatpush1.bf16.msra.mxu0 0
    %145 = vmatprep.subr.bf16.mxu0 0
    %146 = vmatpush1.bf16.msra.mxu0 0
    %147 = vmatprep.subr.bf16.mxu0 0
    %148 = vmatpush1.bf16.msra.mxu0 0
    %149 = vmatprep.subr.bf16.mxu0 0
    %150 = vmatpush1.bf16.msra.mxu0 0
    %151 = vmatprep.subr.bf16.mxu0 0
    %152 = vmatpush1.bf16.msra.mxu0 0
    %153 = vmatprep.subr.bf16.mxu0 0
    %154 = vmatpush1.bf16.msra.mxu0 0
    %155 = vmatprep.mubr.bf16.mxu0 0
    %156 = vmatmul.mubr.bf16.gmra.mrb[0].mxu0 %v73
    %v157 = vpop.f32.mrb[0].mxu0
    %v158 = vadd.f32 %v67, %v157
    %v159 = vpop.f32.mrb[0].mxu0
    %v160 = vpop.f32.mrb[0].mxu0
    %v161 = vadd.f32 %v67, %v160
    %v162 = vpop.f32.mrb[0].mxu0
    %163 = vdwg.mxu0
    %v164 = vmax.f32 %v158, 0.0
    %v165 = vmax.f32 %v161, 0.0
    %v166 = vpack.c.bf16 %v165, %v164
    %v168 = vunpack.c.l.b16 %v166
    %v169 = vunpack.c.h.b16 %v166
    %v170 = vpack.c.b16 %v168, %v168
    %v171 = vpack.c.b16 %v169, %v169
    %174 = vst [vmem:[#allocation7] sm:$0xf] %v170
    %175 = vst [vmem:[#allocation7 + $0x4] sm:$0xf] %v171
    // Predicated region
    $region22: #{tpu_custom_call.1} parent=1 // pred_check
      _
    $region23: #{tpu_custom_call.1} parent=1 // pred_check_branch
      %177 = sbr.rel (0) target = $region25
    $region24: #{tpu_custom_call.1} parent=1 // pred_region
      %s179 = ssub.s32 128, 128
      %180 = vsyncadd [#allocation4], %s179
      %s181 = sshll.u32 [#allocation7], 4
      %s182 = int_to_ptr.vmem [resolvable:$true] %s181
      %187 = dma.vmem_to_hbm [thread:$0]  %s182, 128, %s3, [#allocation4], 64, 64, 4
    $region25: #{tpu_custom_call.1} parent=1 // pred_fallthru
      _
    // Predicated region
    $region26: #{tpu_custom_call.1} parent=1 // pred_check
      _
    $region27: #{tpu_custom_call.1} parent=1 // pred_check_branch
      %189 = sbr.rel (0) target = $region29
    $region28: #{tpu_custom_call.1} parent=1 // pred_region
      %190 = dma.done [#allocation4], 128
    $region29: #{tpu_custom_call.1} parent=1 // pred_fallthru
      _
    %191 = vsyncpa [#allocation3], 1
    %192 = vsyncpa [#allocation6], 1
    %193 = vsyncpa [#allocation4], 1

</llo_original>
